<compile_context>
chip_gen: v5e
topology: v5e:2x2
jax: 0.10.0
libtpu: 0.0.40
codegen_flags: <defaults>
</compile_context>

<pallas_src>
import jax
import jax.numpy as jnp
from jax.experimental import pallas as pl
from jax.experimental.pallas import tpu as pltpu

IGNORE_INDEX = 255


# ----------------------------------------------------------------------------
# Fused kernel: H-interp (single MXU matmul) + softmax / CE / Lovasz error prep
# ----------------------------------------------------------------------------
def _fused_upsample_loss_kernel(a_ref, xw_ref, lab_ref, err_ref, stats_ref, ex_sc):
    """One (batch, H-tile) grid step.

    a_ref    : (TILE_H, Hin)      f32   H-interp rows for this tile (zero pad rows)
    xw_ref   : (Hin, C*Wpad)      f32   W-interpolated logits of this image
    lab_ref  : (TILE_H, Wpad)     int32 labels (255 = ignore / padding)
    err_ref  : (C, TILE_H, Wpad)  bf16  |fg - softmax| * valid  (Lovasz errors)
    stats_ref: (8, 128)           f32   row 0 = sum(nll), row 1 = #valid pixels
    ex_sc    : (TILE_H, C*Wpad)   f32   scratch: logits, then exp(logit - max)
    """
    num_classes, _, wpad = err_ref.shape

    # H-interp: one MXU matmul producing all classes at once.  The class blocks
    # along lanes are Wpad-aligned (multiple of 128), so every slice below is a
    # free, aligned lane slice and every store is unmasked.
    ex_sc[...] = jnp.dot(a_ref[...], xw_ref[...],
                         preferred_element_type=jnp.float32)

    labels = lab_ref[...]
    validf = (labels != IGNORE_INDEX).astype(jnp.float32)

    # Numerically stable softmax: per-pixel max over classes.
    m = ex_sc[:, 0:wpad]
    for c in range(1, num_classes):
        m = jnp.maximum(m, ex_sc[:, c * wpad:(c + 1) * wpad])

    # One exp per class; cache exp(z_c) back into the scratch (overwriting the
    # logits) and pick out z_target for the CE term on the fly.
    se = jnp.zeros_like(m)
    zt = jnp.zeros_like(m)     # z of the target class
    hit = jnp.zeros_like(m)    # 1.0 where the label is a real class in [0, C)
    for c in range(num_classes):
        sl = slice(c * wpad, (c + 1) * wpad)
        z = ex_sc[:, sl] - m
        e = jnp.exp(z)
        se = se + e
        is_c = labels == c
        zt = zt + jnp.where(is_c, z, 0.0)
        hit = hit + is_c.astype(jnp.float32)
        ex_sc[:, sl] = e

    log_se = jnp.log(se)
    inv_se = 1.0 / se          # exact divide (no approx reciprocal)

    # Lovasz error maps, class-major, bf16.
    for c in range(num_classes):
        p = ex_sc[:, c * wpad:(c + 1) * wpad] * inv_se
        fg = (labels == c).astype(jnp.float32)
        err_ref[c] = (jnp.abs(fg - p) * validf).astype(err_ref.dtype)

    # Per-tile CE partial sums (avoid writing a per-pixel NLL map to HBM).
    nll_sum = jnp.sum((log_se - zt) * hit)
    cnt_sum = jnp.sum(validf)
    row = jax.lax.broadcasted_iota(jnp.int32, (8, 128), 0)
    stats_ref[...] = jnp.where(row == 0, nll_sum,
                               jnp.where(row == 1, cnt_sum, 0.0))


# ----------------------------------------------------------------------------
# Helpers
# ----------------------------------------------------------------------------
def _round_up(x, m):
    return ((x + m - 1) // m) * m


def _interp_matrix(out_size: int, in_size: int):
    """1-D linear interpolation matrix (align_corners=True), f32, (out, in)."""
    if out_size == 1:
        coords = jnp.zeros((1,), jnp.float32)
    else:
        coords = jnp.arange(out_size, dtype=jnp.float32) * (
            (in_size - 1) / (out_size - 1))
    lo = jnp.clip(jnp.floor(coords).astype(jnp.int32), 0, in_size - 1)
    hi = jnp.clip(lo + 1, 0, in_size - 1)
    frac = coords - lo.astype(jnp.float32)
    cols = jnp.arange(in_size, dtype=jnp.int32)
    mat = (cols[None, :] == lo[:, None]).astype(jnp.float32) * (1.0 - frac)[:, None]
    mat = mat + (cols[None, :] == hi[:, None]).astype(jnp.float32) * frac[:, None]
    return mat


def _tpu_vmem_capacity_bytes():
    try:
        return int(pltpu.get_tpu_info().vmem_capacity_bytes)
    except Exception:
        pass
    try:
        kind = jax.devices()[0].device_kind.lower()
        if "v7" in kind:
            return 64 << 20
        return 128 << 20
    except Exception:
        return 64 << 20   # conservative default


def _choose_tiling(h, wpad, num_classes):
    """Generation-gated H tile: big tiles on 128 MiB-VMEM chips, smaller on v7x."""
    vmem_cap = _tpu_vmem_capacity_bytes()
    if vmem_cap >= (100 << 20):          # v5e / v6e (128 MiB VMEM)
        budget, vmem_limit = 12 << 20, 64 << 20
    else:                                # v7x (64 MiB VMEM per TC) or unknown
        budget, vmem_limit = 6 << 20, 44 << 20
    bytes_per_row = num_classes * wpad * 4          # f32 class-major scratch
    tile_max = max(16, min(512, budget // bytes_per_row))
    tile_max = (tile_max // 16) * 16
    n_tiles = max(1, -(-h // tile_max))             # cdiv
    tile_h = _round_up(-(-h // n_tiles), 16)        # minimize H padding waste
    return tile_h, n_tiles * tile_h, vmem_limit


def fused_upsample_loss_prep(a_mat, xw, labels_pad, num_classes, tile_h, vmem_limit):
    b, hin, cwpad = xw.shape
    hpad = a_mat.shape[0]
    wpad = cwpad // num_classes
    nht = hpad // tile_h
    return pl.pallas_call(
        _fused_upsample_loss_kernel,
        out_shape=(
            jax.ShapeDtypeStruct((num_classes, b, hpad, wpad), jnp.bfloat16),  # err
            jax.ShapeDtypeStruct((b, nht, 8, 128), jnp.float32),               # stats
        ),
        grid=(b, nht),
        in_specs=[
            pl.BlockSpec((tile_h, hin), lambda bi, hi: (hi, 0)),               # A rows
            pl.BlockSpec((None, hin, cwpad), lambda bi, hi: (bi, 0, 0)),       # xw
            pl.BlockSpec((None, tile_h, wpad), lambda bi, hi: (bi, hi, 0)),    # labels
        ],
        out_specs=(
            pl.BlockSpec((num_classes, None, tile_h, wpad),
                         lambda bi, hi: (0, bi, hi, 0)),
            pl.BlockSpec((None, None, 8, 128), lambda bi, hi: (bi, hi, 0, 0)),
        ),
        scratch_shapes=[pltpu.VMEM((tile_h, cwpad), jnp.float32)],
        compiler_params=pltpu.CompilerParams(
            dimension_semantics=("parallel", "parallel"),
            vmem_limit_bytes=vmem_limit,
        ),
    )(a_mat, xw, labels_pad)


# ----------------------------------------------------------------------------
# Full CriterionOhemDSN2 forward
# ----------------------------------------------------------------------------
@jax.jit
def criterion_ohem_dsn2(pred0, target):
    b, c, hin, win = pred0.shape
    tb, h, w = target.shape
    assert b == tb

    wpad = _round_up(w, 128)
    tile_h, hpad, vmem_limit = _choose_tiling(h, wpad, c)

    # Separable align_corners=True bilinear: W-interp here (one small f32 XLA
    # matmul on the low-res logits), H-interp inside the Pallas kernel.
    a_mat = _interp_matrix(h, hin)                                    # (h, hin)
    a_mat = jnp.pad(a_mat, ((0, hpad - h), (0, 0)))                   # zero pad rows
    bt = jnp.pad(_interp_matrix(w, win).T, ((0, 0), (0, wpad - w)))   # (win, wpad)

    x_t = jnp.transpose(pred0.astype(jnp.float32), (0, 2, 1, 3))      # (b, hin, c, win)
    xw = jnp.matmul(x_t, bt,
                    precision=jax.lax.Precision.HIGHEST)              # (b, hin, c, wpad)
    xw = xw.reshape(b, hin, c * wpad)

    labels = target.astype(jnp.int32)
    labels_pad = jnp.pad(labels, ((0, 0), (0, hpad - h), (0, wpad - w)),
                         constant_values=IGNORE_INDEX)

    err, stats = fused_upsample_loss_prep(a_mat, xw, labels_pad, c, tile_h,
                                          vmem_limit)

    # ---- loss1: CrossEntropyLoss(ignore_index=255, reduction='mean') ----
    nll_total = jnp.sum(stats[:, :, 0, 0])
    valid_cnt = jnp.sum(stats[:, :, 1, 0])
    loss1 = nll_total / jnp.maximum(valid_cnt, 1.0)

    # ---- loss2: Lovasz-Softmax over 'present' classes ----
    # Ignored / padded pixels carry err = 0 and fg = 0: they sort last and
    # contribute 0 -- equivalent to filtering them out of the loss.
    # TODO(synk): the per-class descending sort + cumsum have no clean Pallas
    #             TPU equivalent; they stay in XLA, but as ONE multi-operand
    #             lax.sort (no argsort + random gathers).
    p_tot = err.shape[1] * err.shape[2] * err.shape[3]
    err_cm = err.reshape(c, p_tot)                                    # (C, P) bf16
    labels_flat = labels_pad.reshape(p_tot)
    cls_ids = jnp.arange(c, dtype=jnp.int32)[:, None]
    fg = (labels_flat[None, :] == cls_ids).astype(jnp.bfloat16)       # (C, P)

    neg_sorted, fg_sorted = jax.lax.sort((-err_cm, fg), dimension=1, num_keys=1)
    err_sorted = (-neg_sorted).astype(jnp.float32)
    fg_sorted = fg_sorted.astype(jnp.float32)

    gts = jnp.sum(fg_sorted, axis=1, keepdims=True)                   # (C, 1)
    inter = gts - jnp.cumsum(fg_sorted, axis=1)
    union = gts + jnp.cumsum(1.0 - fg_sorted, axis=1)
    jac = 1.0 - inter / union
    grad = jnp.concatenate([jac[:, :1], jac[:, 1:] - jac[:, :-1]], axis=1)
    losses = jnp.sum(err_sorted * grad, axis=1)                       # (C,)

    present = gts[:, 0] > 0.0                                         # 'present' filter
    n_present = jnp.sum(present.astype(jnp.float32))
    loss2 = jnp.where(
        n_present > 0,
        jnp.sum(jnp.where(present, losses, 0.0)) / jnp.maximum(n_present, 1.0),
        0.0)

    return loss1 + loss2


def forward(preds, target):
    """Mirror of CriterionOhemDSN2.forward: preds is a sequence, only preds[0] is used."""
    return criterion_ohem_dsn2(preds[0], target)


if __name__ == "__main__":
    key = jax.random.PRNGKey(0)
    k1, k2, k3, k4 = jax.random.split(key, 4)

    B, C, Hin, Win = 2, 4, 8, 8       # preds[0] at half resolution
    H, W = 16, 16                     # target resolution

    pred0 = jax.random.normal(k1, (B, C, Hin, Win), jnp.float32)
    pred1 = jax.random.normal(k2, (B, C, Hin, Win), jnp.float32)  # unused DSN head

    target = jax.random.randint(k3, (B, H, W), 0, C).astype(jnp.int32)
    ignore_mask = jax.random.bernoulli(k4, 0.1, (B, H, W))
    target = jnp.where(ignore_mask, IGNORE_INDEX, target)

    loss = forward((pred0, pred1), target)
    loss = jax.block_until_ready(loss)
    assert jnp.isfinite(loss), f"non-finite loss: {loss}"
    print("KERNEL_OK")
</pallas_src>

<mosaic_0001>
module attributes {stable_mosaic.version = 11 : i64} {
  func.func @_fused_upsample_loss_kernel(%arg0: i32, %arg1: i32, %arg2: memref<16x8xf32, #tpu.memory_space<vmem>>, %arg3: memref<1x8x512xf32, #tpu.memory_space<vmem>>, %arg4: memref<1x16x128xi32, #tpu.memory_space<vmem>>, %arg5: memref<4x1x16x128xbf16, #tpu.memory_space<vmem>>, %arg6: memref<1x1x8x128xf32, #tpu.memory_space<vmem>>, %arg7: memref<16x512xf32, #tpu.memory_space<vmem>>) attributes {dimension_semantics = [#tpu.dimension_semantics<parallel>, #tpu.dimension_semantics<parallel>], iteration_bounds = array<i64: 2, 1>, scalar_prefetch = 0 : i64, scratch_operands = 1 : i64, tpu.core_type = #tpu.core_type<tc>, window_params = [{transform_indices = @transform_0, window_bounds = array<i64: 16, 8>}, {transform_indices = @transform_1, window_bounds = array<i64: 1, 8, 512>}, {transform_indices = @transform_2, window_bounds = array<i64: 1, 16, 128>}, {transform_indices = @transform_3, window_bounds = array<i64: 4, 1, 16, 128>}, {transform_indices = @transform_4, window_bounds = array<i64: 1, 1, 8, 128>}]} {
    %c0 = arith.constant 0 : index
    %c0_0 = arith.constant 0 : index
    %0 = vector.load %arg2[%c0, %c0_0] : memref<16x8xf32, #tpu.memory_space<vmem>>, vector<16x8xf32>
    %c0_1 = arith.constant 0 : index
    %c0_2 = arith.constant 0 : index
    %c0_3 = arith.constant 0 : index
    %1 = vector.load %arg3[%c0_1, %c0_2, %c0_3] : memref<1x8x512xf32, #tpu.memory_space<vmem>>, vector<1x8x512xf32>
    %2 = vector.shape_cast %1 : vector<1x8x512xf32> to vector<8x512xf32>
    %cst = arith.constant dense<0.000000e+00> : vector<16x512xf32>
    %3 = tpu.matmul %0, %2, %cst {dimension_numbers = #tpu.dot_dimension_numbers<[1], [0], [0], [1], [0, 0, 1, 1], [], []>} : vector<16x8xf32>, vector<8x512xf32>, vector<16x512xf32> -> vector<16x512xf32>
    %c0_4 = arith.constant 0 : index
    %c0_5 = arith.constant 0 : index
    %4 = vector.load %arg7[%c0_4, %c0_5] : memref<16x512xf32, #tpu.memory_space<vmem>>, vector<16x512xf32>
    tpu.vector_store %arg7[%c0_4, %c0_5], %3 {strides = array<i32>} : memref<16x512xf32, #tpu.memory_space<vmem>>, vector<16x512xf32>,
    %c0_6 = arith.constant 0 : index
    %c0_7 = arith.constant 0 : index
    %c0_8 = arith.constant 0 : index
    %5 = vector.load %arg4[%c0_6, %c0_7, %c0_8] : memref<1x16x128xi32, #tpu.memory_space<vmem>>, vector<1x16x128xi32>
    %6 = vector.shape_cast %5 : vector<1x16x128xi32> to vector<16x128xi32>
    %c255_i32 = arith.constant 255 : i32
    %7 = vector.broadcast %c255_i32 : i32 to vector<16x128xi32>
    %8 = arith.cmpi ne, %6, %7 : vector<16x128xi32>
    %9 = arith.extui %8 : vector<16x128xi1> to vector<16x128xi32>
    %10 = arith.sitofp %9 : vector<16x128xi32> to vector<16x128xf32>
    %c0_9 = arith.constant 0 : index
    %c0_10 = arith.constant 0 : index
    %11 = vector.load %arg7[%c0_9, %c0_10] : memref<16x512xf32, #tpu.memory_space<vmem>>, vector<16x128xf32>
    %c0_11 = arith.constant 0 : index
    %c128 = arith.constant 128 : index
    %12 = vector.load %arg7[%c0_11, %c128] : memref<16x512xf32, #tpu.memory_space<vmem>>, vector<16x128xf32>
    %13 = arith.maximumf %11, %12 : vector<16x128xf32>
    %c0_12 = arith.constant 0 : index
    %c256 = arith.constant 256 : index
    %14 = vector.load %arg7[%c0_12, %c256] : memref<16x512xf32, #tpu.memory_space<vmem>>, vector<16x128xf32>
    %15 = arith.maximumf %13, %14 : vector<16x128xf32>
    %c0_13 = arith.constant 0 : index
    %c384 = arith.constant 384 : index
    %16 = vector.load %arg7[%c0_13, %c384] : memref<16x512xf32, #tpu.memory_space<vmem>>, vector<16x128xf32>
    %17 = arith.maximumf %15, %16 : vector<16x128xf32>
    %cst_14 = arith.constant 0.000000e+00 : f32
    %18 = vector.broadcast %cst_14 : f32 to vector<16x128xf32>
    %cst_15 = arith.constant 0.000000e+00 : f32
    %19 = vector.broadcast %cst_15 : f32 to vector<16x128xf32>
    %cst_16 = arith.constant 0.000000e+00 : f32
    %20 = vector.broadcast %cst_16 : f32 to vector<16x128xf32>
    %c0_17 = arith.constant 0 : index
    %c0_18 = arith.constant 0 : index
    %21 = vector.load %arg7[%c0_17, %c0_18] : memref<16x512xf32, #tpu.memory_space<vmem>>, vector<16x128xf32>
    %22 = arith.subf %21, %17 : vector<16x128xf32>
    %23 = math.exp %22 : vector<16x128xf32>
    %24 = arith.addf %18, %23 : vector<16x128xf32>
    %c0_i32 = arith.constant 0 : i32
    %25 = vector.broadcast %c0_i32 : i32 to vector<16x128xi32>
    %26 = arith.cmpi eq, %6, %25 : vector<16x128xi32>
    %cst_19 = arith.constant 0.000000e+00 : f32
    %27 = vector.broadcast %cst_19 : f32 to vector<16x128xf32>
    %28 = arith.select %26, %22, %27 : vector<16x128xi1>, vector<16x128xf32>
    %29 = arith.addf %19, %28 : vector<16x128xf32>
    %30 = arith.extui %26 : vector<16x128xi1> to vector<16x128xi32>
    %31 = arith.sitofp %30 : vector<16x128xi32> to vector<16x128xf32>
    %32 = arith.addf %20, %31 : vector<16x128xf32>
    %c0_20 = arith.constant 0 : index
    %c0_21 = arith.constant 0 : index
    %33 = vector.load %arg7[%c0_20, %c0_21] : memref<16x512xf32, #tpu.memory_space<vmem>>, vector<16x128xf32>
    tpu.vector_store %arg7[%c0_20, %c0_21], %23 {strides = array<i32>} : memref<16x512xf32, #tpu.memory_space<vmem>>, vector<16x128xf32>,
    %c0_22 = arith.constant 0 : index
    %c128_23 = arith.constant 128 : index
    %34 = vector.load %arg7[%c0_22, %c128_23] : memref<16x512xf32, #tpu.memory_space<vmem>>, vector<16x128xf32>
    %35 = arith.subf %34, %17 : vector<16x128xf32>
    %36 = math.exp %35 : vector<16x128xf32>
    %37 = arith.addf %24, %36 : vector<16x128xf32>
    %c1_i32 = arith.constant 1 : i32
    %38 = vector.broadcast %c1_i32 : i32 to vector<16x128xi32>
    %39 = arith.cmpi eq, %6, %38 : vector<16x128xi32>
    %cst_24 = arith.constant 0.000000e+00 : f32
    %40 = vector.broadcast %cst_24 : f32 to vector<16x128xf32>
    %41 = arith.select %39, %35, %40 : vector<16x128xi1>, vector<16x128xf32>
    %42 = arith.addf %29, %41 : vector<16x128xf32>
    %43 = arith.extui %39 : vector<16x128xi1> to vector<16x128xi32>
    %44 = arith.sitofp %43 : vector<16x128xi32> to vector<16x128xf32>
    %45 = arith.addf %32, %44 : vector<16x128xf32>
    %c0_25 = arith.constant 0 : index
    %c128_26 = arith.constant 128 : index
    %46 = vector.load %arg7[%c0_25, %c128_26] : memref<16x512xf32, #tpu.memory_space<vmem>>, vector<16x128xf32>
    tpu.vector_store %arg7[%c0_25, %c128_26], %36 {strides = array<i32>} : memref<16x512xf32, #tpu.memory_space<vmem>>, vector<16x128xf32>,
    %c0_27 = arith.constant 0 : index
    %c256_28 = arith.constant 256 : index
    %47 = vector.load %arg7[%c0_27, %c256_28] : memref<16x512xf32, #tpu.memory_space<vmem>>, vector<16x128xf32>
    %48 = arith.subf %47, %17 : vector<16x128xf32>
    %49 = math.exp %48 : vector<16x128xf32>
    %50 = arith.addf %37, %49 : vector<16x128xf32>
    %c2_i32 = arith.constant 2 : i32
    %51 = vector.broadcast %c2_i32 : i32 to vector<16x128xi32>
    %52 = arith.cmpi eq, %6, %51 : vector<16x128xi32>
    %cst_29 = arith.constant 0.000000e+00 : f32
    %53 = vector.broadcast %cst_29 : f32 to vector<16x128xf32>
    %54 = arith.select %52, %48, %53 : vector<16x128xi1>, vector<16x128xf32>
    %55 = arith.addf %42, %54 : vector<16x128xf32>
    %56 = arith.extui %52 : vector<16x128xi1> to vector<16x128xi32>
    %57 = arith.sitofp %56 : vector<16x128xi32> to vector<16x128xf32>
    %58 = arith.addf %45, %57 : vector<16x128xf32>
    %c0_30 = arith.constant 0 : index
    %c256_31 = arith.constant 256 : index
    %59 = vector.load %arg7[%c0_30, %c256_31] : memref<16x512xf32, #tpu.memory_space<vmem>>, vector<16x128xf32>
    tpu.vector_store %arg7[%c0_30, %c256_31], %49 {strides = array<i32>} : memref<16x512xf32, #tpu.memory_space<vmem>>, vector<16x128xf32>,
    %c0_32 = arith.constant 0 : index
    %c384_33 = arith.constant 384 : index
    %60 = vector.load %arg7[%c0_32, %c384_33] : memref<16x512xf32, #tpu.memory_space<vmem>>, vector<16x128xf32>
    %61 = arith.subf %60, %17 : vector<16x128xf32>
    %62 = math.exp %61 : vector<16x128xf32>
    %63 = arith.addf %50, %62 : vector<16x128xf32>
    %c3_i32 = arith.constant 3 : i32
    %64 = vector.broadcast %c3_i32 : i32 to vector<16x128xi32>
    %65 = arith.cmpi eq, %6, %64 : vector<16x128xi32>
    %cst_34 = arith.constant 0.000000e+00 : f32
    %66 = vector.broadcast %cst_34 : f32 to vector<16x128xf32>
    %67 = arith.select %65, %61, %66 : vector<16x128xi1>, vector<16x128xf32>
    %68 = arith.addf %55, %67 : vector<16x128xf32>
    %69 = arith.extui %65 : vector<16x128xi1> to vector<16x128xi32>
    %70 = arith.sitofp %69 : vector<16x128xi32> to vector<16x128xf32>
    %71 = arith.addf %58, %70 : vector<16x128xf32>
    %c0_35 = arith.constant 0 : index
    %c384_36 = arith.constant 384 : index
    %72 = vector.load %arg7[%c0_35, %c384_36] : memref<16x512xf32, #tpu.memory_space<vmem>>, vector<16x128xf32>
    tpu.vector_store %arg7[%c0_35, %c384_36], %62 {strides = array<i32>} : memref<16x512xf32, #tpu.memory_space<vmem>>, vector<16x128xf32>,
    %73 = math.log %63 : vector<16x128xf32>
    %cst_37 = arith.constant 1.000000e+00 : f32
    %74 = vector.broadcast %cst_37 : f32 to vector<16x128xf32>
    %75 = arith.divf %74, %63 : vector<16x128xf32>
    %c0_38 = arith.constant 0 : index
    %c0_39 = arith.constant 0 : index
    %76 = vector.load %arg7[%c0_38, %c0_39] : memref<16x512xf32, #tpu.memory_space<vmem>>, vector<16x128xf32>
    %77 = arith.mulf %76, %75 : vector<16x128xf32>
    %c0_i32_40 = arith.constant 0 : i32
    %78 = vector.broadcast %c0_i32_40 : i32 to vector<16x128xi32>
    %79 = arith.cmpi eq, %6, %78 : vector<16x128xi32>
    %80 = arith.extui %79 : vector<16x128xi1> to vector<16x128xi32>
    %81 = arith.sitofp %80 : vector<16x128xi32> to vector<16x128xf32>
    %82 = arith.subf %81, %77 : vector<16x128xf32>
    %83 = math.absf %82 : vector<16x128xf32>
    %84 = arith.mulf %83, %10 : vector<16x128xf32>
    %85 = arith.truncf %84 : vector<16x128xf32> to vector<16x128xbf16>
    %c0_41 = arith.constant 0 : index
    %c0_42 = arith.constant 0 : index
    %c0_43 = arith.constant 0 : index
    %c0_44 = arith.constant 0 : index
    %86 = vector.load %arg5[%c0_41, %c0_42, %c0_43, %c0_44] : memref<4x1x16x128xbf16, #tpu.memory_space<vmem>>, vector<1x1x16x128xbf16>
    %87 = vector.shape_cast %86 : vector<1x1x16x128xbf16> to vector<16x128xbf16>
    %88 = vector.shape_cast %85 : vector<16x128xbf16> to vector<1x1x16x128xbf16>
    tpu.vector_store %arg5[%c0_41, %c0_42, %c0_43, %c0_44], %88 {strides = array<i32>} : memref<4x1x16x128xbf16, #tpu.memory_space<vmem>>, vector<1x1x16x128xbf16>,
    %c0_45 = arith.constant 0 : index
    %c128_46 = arith.constant 128 : index
    %89 = vector.load %arg7[%c0_45, %c128_46] : memref<16x512xf32, #tpu.memory_space<vmem>>, vector<16x128xf32>
    %90 = arith.mulf %89, %75 : vector<16x128xf32>
    %c1_i32_47 = arith.constant 1 : i32
    %91 = vector.broadcast %c1_i32_47 : i32 to vector<16x128xi32>
    %92 = arith.cmpi eq, %6, %91 : vector<16x128xi32>
    %93 = arith.extui %92 : vector<16x128xi1> to vector<16x128xi32>
    %94 = arith.sitofp %93 : vector<16x128xi32> to vector<16x128xf32>
    %95 = arith.subf %94, %90 : vector<16x128xf32>
    %96 = math.absf %95 : vector<16x128xf32>
    %97 = arith.mulf %96, %10 : vector<16x128xf32>
    %98 = arith.truncf %97 : vector<16x128xf32> to vector<16x128xbf16>
    %c1 = arith.constant 1 : index
    %c0_48 = arith.constant 0 : index
    %c0_49 = arith.constant 0 : index
    %c0_50 = arith.constant 0 : index
    %99 = vector.load %arg5[%c1, %c0_48, %c0_49, %c0_50] : memref<4x1x16x128xbf16, #tpu.memory_space<vmem>>, vector<1x1x16x128xbf16>
    %100 = vector.shape_cast %99 : vector<1x1x16x128xbf16> to vector<16x128xbf16>
    %101 = vector.shape_cast %98 : vector<16x128xbf16> to vector<1x1x16x128xbf16>
    tpu.vector_store %arg5[%c1, %c0_48, %c0_49, %c0_50], %101 {strides = array<i32>} : memref<4x1x16x128xbf16, #tpu.memory_space<vmem>>, vector<1x1x16x128xbf16>,
    %c0_51 = arith.constant 0 : index
    %c256_52 = arith.constant 256 : index
    %102 = vector.load %arg7[%c0_51, %c256_52] : memref<16x512xf32, #tpu.memory_space<vmem>>, vector<16x128xf32>
    %103 = arith.mulf %102, %75 : vector<16x128xf32>
    %c2_i32_53 = arith.constant 2 : i32
    %104 = vector.broadcast %c2_i32_53 : i32 to vector<16x128xi32>
    %105 = arith.cmpi eq, %6, %104 : vector<16x128xi32>
    %106 = arith.extui %105 : vector<16x128xi1> to vector<16x128xi32>
    %107 = arith.sitofp %106 : vector<16x128xi32> to vector<16x128xf32>
    %108 = arith.subf %107, %103 : vector<16x128xf32>
    %109 = math.absf %108 : vector<16x128xf32>
    %110 = arith.mulf %109, %10 : vector<16x128xf32>
    %111 = arith.truncf %110 : vector<16x128xf32> to vector<16x128xbf16>
    %c2 = arith.constant 2 : index
    %c0_54 = arith.constant 0 : index
    %c0_55 = arith.constant 0 : index
    %c0_56 = arith.constant 0 : index
    %112 = vector.load %arg5[%c2, %c0_54, %c0_55, %c0_56] : memref<4x1x16x128xbf16, #tpu.memory_space<vmem>>, vector<1x1x16x128xbf16>
    %113 = vector.shape_cast %112 : vector<1x1x16x128xbf16> to vector<16x128xbf16>
    %114 = vector.shape_cast %111 : vector<16x128xbf16> to vector<1x1x16x128xbf16>
    tpu.vector_store %arg5[%c2, %c0_54, %c0_55, %c0_56], %114 {strides = array<i32>} : memref<4x1x16x128xbf16, #tpu.memory_space<vmem>>, vector<1x1x16x128xbf16>,
    %c0_57 = arith.constant 0 : index
    %c384_58 = arith.constant 384 : index
    %115 = vector.load %arg7[%c0_57, %c384_58] : memref<16x512xf32, #tpu.memory_space<vmem>>, vector<16x128xf32>
    %116 = arith.mulf %115, %75 : vector<16x128xf32>
    %c3_i32_59 = arith.constant 3 : i32
    %117 = vector.broadcast %c3_i32_59 : i32 to vector<16x128xi32>
    %118 = arith.cmpi eq, %6, %117 : vector<16x128xi32>
    %119 = arith.extui %118 : vector<16x128xi1> to vector<16x128xi32>
    %120 = arith.sitofp %119 : vector<16x128xi32> to vector<16x128xf32>
    %121 = arith.subf %120, %116 : vector<16x128xf32>
    %122 = math.absf %121 : vector<16x128xf32>
    %123 = arith.mulf %122, %10 : vector<16x128xf32>
    %124 = arith.truncf %123 : vector<16x128xf32> to vector<16x128xbf16>
    %c3 = arith.constant 3 : index
    %c0_60 = arith.constant 0 : index
    %c0_61 = arith.constant 0 : index
    %c0_62 = arith.constant 0 : index
    %125 = vector.load %arg5[%c3, %c0_60, %c0_61, %c0_62] : memref<4x1x16x128xbf16, #tpu.memory_space<vmem>>, vector<1x1x16x128xbf16>
    %126 = vector.shape_cast %125 : vector<1x1x16x128xbf16> to vector<16x128xbf16>
    %127 = vector.shape_cast %124 : vector<16x128xbf16> to vector<1x1x16x128xbf16>
    tpu.vector_store %arg5[%c3, %c0_60, %c0_61, %c0_62], %127 {strides = array<i32>} : memref<4x1x16x128xbf16, #tpu.memory_space<vmem>>, vector<1x1x16x128xbf16>,
    %128 = arith.subf %73, %68 : vector<16x128xf32>
    %129 = arith.mulf %128, %71 : vector<16x128xf32>
    %130 = vector.shape_cast %129 : vector<16x128xf32> to vector<1x16x128xf32>
    %cst_63 = arith.constant dense<0.000000e+00> : vector<1xf32>
    %131 = vector.multi_reduction <add>, %130, %cst_63 [1, 2] : vector<1x16x128xf32> to vector<1xf32>
    %132 = vector.shape_cast %131 : vector<1xf32> to vector<1x1x1xf32>
    %133 = vector.extract %132[0, 0, 0] : f32 from vector<1x1x1xf32>
    %134 = vector.shape_cast %10 : vector<16x128xf32> to vector<1x16x128xf32>
    %cst_64 = arith.constant dense<0.000000e+00> : vector<1xf32>
    %135 = vector.multi_reduction <add>, %134, %cst_64 [1, 2] : vector<1x16x128xf32> to vector<1xf32>
    %136 = vector.shape_cast %135 : vector<1xf32> to vector<1x1x1xf32>
    %137 = vector.extract %136[0, 0, 0] : f32 from vector<1x1x1xf32>
    %138 = tpu.iota {dimensions = array<i32: 0>} : vector<8x128xi32>
    %c0_i32_65 = arith.constant 0 : i32
    %139 = vector.broadcast %c0_i32_65 : i32 to vector<8x128xi32>
    %140 = arith.cmpi eq, %138, %139 : vector<8x128xi32>
    %c1_i32_66 = arith.constant 1 : i32
    %141 = vector.broadcast %c1_i32_66 : i32 to vector<8x128xi32>
    %142 = arith.cmpi eq, %138, %141 : vector<8x128xi32>
    %cst_67 = arith.constant 0.000000e+00 : f32
    %143 = vector.broadcast %137 : f32 to vector<8x128xf32>
    %144 = vector.broadcast %cst_67 : f32 to vector<8x128xf32>
    %145 = arith.select %142, %143, %144 : vector<8x128xi1>, vector<8x128xf32>
    %146 = vector.broadcast %133 : f32 to vector<8x128xf32>
    %147 = arith.select %140, %146, %145 : vector<8x128xi1>, vector<8x128xf32>
    %c0_68 = arith.constant 0 : index
    %c0_69 = arith.constant 0 : index
    %c0_70 = arith.constant 0 : index
    %c0_71 = arith.constant 0 : index
    %148 = vector.load %arg6[%c0_68, %c0_69, %c0_70, %c0_71] : memref<1x1x8x128xf32, #tpu.memory_space<vmem>>, vector<1x1x8x128xf32>
    %149 = vector.shape_cast %148 : vector<1x1x8x128xf32> to vector<8x128xf32>
    %150 = vector.shape_cast %147 : vector<8x128xf32> to vector<1x1x8x128xf32>
    tpu.vector_store %arg6[%c0_68, %c0_69, %c0_70, %c0_71], %150 {strides = array<i32>} : memref<1x1x8x128xf32, #tpu.memory_space<vmem>>, vector<1x1x8x128xf32>,
    return
  }
  func.func @transform_0(%arg0: i32, %arg1: i32) -> (i32, i32) {
    %c0_i32 = arith.constant 0 : i32
    %c0_i32_0 = arith.constant 0 : i32
    return %arg1, %c0_i32 : i32, i32
  }
  func.func @transform_1(%arg0: i32, %arg1: i32) -> (i32, i32, i32) {
    %c0_i32 = arith.constant 0 : i32
    %c0_i32_0 = arith.constant 0 : i32
    %c0_i32_1 = arith.constant 0 : i32
    return %arg0, %c0_i32, %c0_i32_0 : i32, i32, i32
  }
  func.func @transform_2(%arg0: i32, %arg1: i32) -> (i32, i32, i32) {
    %c0_i32 = arith.constant 0 : i32
    %c0_i32_0 = arith.constant 0 : i32
    return %arg0, %arg1, %c0_i32 : i32, i32, i32
  }
  func.func @transform_3(%arg0: i32, %arg1: i32) -> (i32, i32, i32, i32) {
    %c0_i32 = arith.constant 0 : i32
    %c0_i32_0 = arith.constant 0 : i32
    %c0_i32_1 = arith.constant 0 : i32
    return %c0_i32, %arg0, %arg1, %c0_i32_0 : i32, i32, i32, i32
  }
  func.func @transform_4(%arg0: i32, %arg1: i32) -> (i32, i32, i32, i32) {
    %c0_i32 = arith.constant 0 : i32
    %c0_i32_0 = arith.constant 0 : i32
    %c0_i32_1 = arith.constant 0 : i32
    return %arg0, %arg1, %c0_i32, %c0_i32_0 : i32, i32, i32, i32
  }
}

</mosaic_0001>

<llo_original>
// kernel: neg.0
$region0: #{neg.0}
  #allocation0 [shape = 's32[1]{0}', space=sflag, size = 0x4, scoped, tag = 'scoped memory for neg.0']
  %s0 = inlined_call_operand.vmem [shape: bf16[4,2,16,128], index: 0, kind: input, shape index: {}]
  %s1 = inlined_call_operand.vmem [shape: bf16[4,2,16,128], index: 1, kind: output, shape index: {}]
  %v2 = vld [vmem:[%s0] sm:$0xf]
  %v3 = vunpack.c.l.bf16 %v2
  %v4 = vunpack.c.h.bf16 %v2
  %5 = xla_tuple %v3
  %6 = xla_tuple %5
  %v7 = vxor.u32 %v3, 2147483648
  %8 = xla_tuple %v7
  %v9 = vpack.c.bf16 0.0, %v7
  %10 = vst [vmem:[%s1] sm:$0xf] %v9
  %s11 = scalar_lea.vmem %s0, 16
  %v12 = vld [vmem:[%s11] sm:$0xf]
  %v13 = vunpack.c.l.bf16 %v12
  %v14 = vunpack.c.h.bf16 %v12
  %15 = xla_tuple %v13
  %16 = xla_tuple %15
  %v17 = vxor.u32 %v13, 2147483648
  %18 = xla_tuple %v17
  %s19 = scalar_lea.vmem %s1, 16
  %v20 = vpack.c.bf16 0.0, %v17
  %21 = vst [vmem:[%s19] sm:$0xf] %v20
  %s22 = scalar_lea.vmem %s0, 32
  %v23 = vld [vmem:[%s22] sm:$0xf]
  %v24 = vunpack.c.l.bf16 %v23
  %v25 = vunpack.c.h.bf16 %v23
  %26 = xla_tuple %v24
  %27 = xla_tuple %26
  %v28 = vxor.u32 %v24, 2147483648
  %29 = xla_tuple %v28
  %s30 = scalar_lea.vmem %s1, 32
  %v31 = vpack.c.bf16 0.0, %v28
  %32 = vst [vmem:[%s30] sm:$0xf] %v31
  %s33 = scalar_lea.vmem %s0, 48
  %v34 = vld [vmem:[%s33] sm:$0xf]
  %v35 = vunpack.c.l.bf16 %v34
  %v36 = vunpack.c.h.bf16 %v34
  %37 = xla_tuple %v35
  %38 = xla_tuple %37
  %v39 = vxor.u32 %v35, 2147483648
  %40 = xla_tuple %v39
  %s41 = scalar_lea.vmem %s1, 48
  %v42 = vpack.c.bf16 0.0, %v39
  %43 = vst [vmem:[%s41] sm:$0xf] %v42
  %s44 = scalar_lea.vmem %s0, 8
  %v45 = vld [vmem:[%s44] sm:$0xf]
  %v46 = vunpack.c.l.bf16 %v45
  %v47 = vunpack.c.h.bf16 %v45
  %48 = xla_tuple %v46
  %49 = xla_tuple %48
  %v50 = vxor.u32 %v46, 2147483648
  %51 = xla_tuple %v50
  %s52 = scalar_lea.vmem %s1, 8
  %v53 = vpack.c.bf16 0.0, %v50
  %54 = vst [vmem:[%s52] sm:$0xf] %v53
  %s55 = scalar_lea.vmem %s0, 24
  %v56 = vld [vmem:[%s55] sm:$0xf]
  %v57 = vunpack.c.l.bf16 %v56
  %v58 = vunpack.c.h.bf16 %v56
  %59 = xla_tuple %v57
  %60 = xla_tuple %59
  %v61 = vxor.u32 %v57, 2147483648
  %62 = xla_tuple %v61
  %s63 = scalar_lea.vmem %s1, 24
  %v64 = vpack.c.bf16 0.0, %v61
  %65 = vst [vmem:[%s63] sm:$0xf] %v64
  %s66 = scalar_lea.vmem %s0, 40
  %v67 = vld [vmem:[%s66] sm:$0xf]
  %v68 = vunpack.c.l.bf16 %v67
  %v69 = vunpack.c.h.bf16 %v67
  %70 = xla_tuple %v68
  %71 = xla_tuple %70
  %v72 = vxor.u32 %v68, 2147483648
  %73 = xla_tuple %v72
  %s74 = scalar_lea.vmem %s1, 40
  %v75 = vpack.c.bf16 0.0, %v72
  %76 = vst [vmem:[%s74] sm:$0xf] %v75
  %s77 = scalar_lea.vmem %s0, 56
  %v78 = vld [vmem:[%s77] sm:$0xf]
  %v79 = vunpack.c.l.bf16 %v78
  %v80 = vunpack.c.h.bf16 %v78
  %81 = xla_tuple %v79
  %82 = xla_tuple %81
  %v83 = vxor.u32 %v79, 2147483648
  %84 = xla_tuple %v83
  %s85 = scalar_lea.vmem %s1, 56
  %v86 = vpack.c.bf16 0.0, %v83
  %87 = vst [vmem:[%s85] sm:$0xf] %v86
  %s88 = scalar_lea.vmem %s0, 4
  %v89 = vld [vmem:[%s88] sm:$0xf]
  %v90 = vunpack.c.l.bf16 %v89
  %v91 = vunpack.c.h.bf16 %v89
  %92 = xla_tuple %v90
  %93 = xla_tuple %92
  %v94 = vxor.u32 %v90, 2147483648
  %95 = xla_tuple %v94
  %s96 = scalar_lea.vmem %s1, 4
  %v97 = vpack.c.bf16 0.0, %v94
  %98 = vst [vmem:[%s96] sm:$0xf] %v97
  %s99 = scalar_lea.vmem %s0, 20
  %v100 = vld [vmem:[%s99] sm:$0xf]
  %v101 = vunpack.c.l.bf16 %v100
  %v102 = vunpack.c.h.bf16 %v100
  %103 = xla_tuple %v101
  %104 = xla_tuple %103
  %v105 = vxor.u32 %v101, 2147483648
  %106 = xla_tuple %v105
  %s107 = scalar_lea.vmem %s1, 20
  %v108 = vpack.c.bf16 0.0, %v105
  %109 = vst [vmem:[%s107] sm:$0xf] %v108
  %s110 = scalar_lea.vmem %s0, 36
  %v111 = vld [vmem:[%s110] sm:$0xf]
  %v112 = vunpack.c.l.bf16 %v111
  %v113 = vunpack.c.h.bf16 %v111
  %114 = xla_tuple %v112
  %115 = xla_tuple %114
  %v116 = vxor.u32 %v112, 2147483648
  %117 = xla_tuple %v116
  %s118 = scalar_lea.vmem %s1, 36
  %v119 = vpack.c.bf16 0.0, %v116
  %120 = vst [vmem:[%s118] sm:$0xf] %v119
  %s121 = scalar_lea.vmem %s0, 52
  %v122 = vld [vmem:[%s121] sm:$0xf]
  %v123 = vunpack.c.l.bf16 %v122
  %v124 = vunpack.c.h.bf16 %v122
  %125 = xla_tuple %v123
  %126 = xla_tuple %125
  %v127 = vxor.u32 %v123, 2147483648
  %128 = xla_tuple %v127
  %s129 = scalar_lea.vmem %s1, 52
  %v130 = vpack.c.bf16 0.0, %v127
  %131 = vst [vmem:[%s129] sm:$0xf] %v130
  %s132 = scalar_lea.vmem %s0, 12
  %v133 = vld [vmem:[%s132] sm:$0xf]
  %v134 = vunpack.c.l.bf16 %v133
  %v135 = vunpack.c.h.bf16 %v133
  %136 = xla_tuple %v134
  %137 = xla_tuple %136
  %v138 = vxor.u32 %v134, 2147483648
  %139 = xla_tuple %v138
  %s140 = scalar_lea.vmem %s1, 12
  %v141 = vpack.c.bf16 0.0, %v138
  %142 = vst [vmem:[%s140] sm:$0xf] %v141
  %s143 = scalar_lea.vmem %s0, 28
  %v144 = vld [vmem:[%s143] sm:$0xf]
  %v145 = vunpack.c.l.bf16 %v144
  %v146 = vunpack.c.h.bf16 %v144
  %147 = xla_tuple %v145
  %148 = xla_tuple %147
  %v149 = vxor.u32 %v145, 2147483648
  %150 = xla_tuple %v149
  %s151 = scalar_lea.vmem %s1, 28
  %v152 = vpack.c.bf16 0.0, %v149
  %153 = vst [vmem:[%s151] sm:$0xf] %v152
  %s154 = scalar_lea.vmem %s0, 44
  %v155 = vld [vmem:[%s154] sm:$0xf]
  %v156 = vunpack.c.l.bf16 %v155
  %v157 = vunpack.c.h.bf16 %v155
  %158 = xla_tuple %v156
  %159 = xla_tuple %158
  %v160 = vxor.u32 %v156, 2147483648
  %161 = xla_tuple %v160
  %s162 = scalar_lea.vmem %s1, 44
  %v163 = vpack.c.bf16 0.0, %v160
  %164 = vst [vmem:[%s162] sm:$0xf] %v163
  %s165 = scalar_lea.vmem %s0, 60
  %v166 = vld [vmem:[%s165] sm:$0xf]
  %v167 = vunpack.c.l.bf16 %v166
  %v168 = vunpack.c.h.bf16 %v166
  %169 = xla_tuple %v167
  %170 = xla_tuple %169
  %v171 = vxor.u32 %v167, 2147483648
  %172 = xla_tuple %v171
  %s173 = scalar_lea.vmem %s1, 60
  %v174 = vpack.c.bf16 0.0, %v171
  %175 = vst [vmem:[%s173] sm:$0xf] %v174

// kernel: criterion_ohem_dsn2.1
$region0: #{criterion_ohem_dsn2.1}
  #allocation0 [shape = 'u32[]', space=smem, size = 0x4, offset = 0x4, fixed_abs, tag = 'smem constant byte address 0x4 - core index']
  #allocation1 [shape = 'u32[72,128]{1,0:T(1,128)}', space=vmem, size = 0x9000, scoped, tag = 'internal scratch']
  #allocation2 [shape = 'f32[16,512]{1,0:T(8,128)}', space=vmem, size = 0x8000, scoped, tag = 'scratch operand']
  %s0 = inlined_call_operand.vmem [shape: f32[16,8], index: 0, kind: input, shape index: {}]
  %s1 = inlined_call_operand.vmem [shape: f32[2,8,512], index: 1, kind: input, shape index: {}]
  %s2 = inlined_call_operand.vmem [shape: s32[2,16,128], index: 2, kind: input, shape index: {}]
  %s3 = inlined_call_operand.vmem [shape: bf16[4,2,16,128], index: 3, kind: output, shape index: {0}]
  %s4 = inlined_call_operand.vmem [shape: f32[2,1,8,128], index: 4, kind: output, shape index: {1}]
  %5 = xla_tuple %s3, %s4
  %s6 = sld [smem:[#allocation0]]
  $region90: #{criterion_ohem_dsn2.1} parent=0
    _
  %s8 = ssub.s32 1, %s6
  %s9 = scalar_select 0, %s8, %s6
  $region1: #{criterion_ohem_dsn2.1} parent=0
    #allocation3 [shape = 'u8[32768]{0}', space=vmem, size = 0x8000, scoped, tag = 'output window, operand 0']
    loop: start=0, step=1, limit=4
    $region2: #{criterion_ohem_dsn2.1} parent=1 // loop_pre_header
      _
    $region3: #{criterion_ohem_dsn2.1} parent=1 // loop_header
      %s11 = sphi 0, %s15
      %p12 = scmp.ge.s32.totalorder %s11, 4
      %s18 = sphi 0, %s30
      %s19 = sphi 0, %s26
      %s20 = sphi 0, %s18
      %s21 = sphi 0, %s19
      %s22 = sphi 0, %s20
      %s23 = sphi 0, %s21
      %s33 = sphi 0, %s35
      %s36 = sphi 0, %s33
      %s37 = sphi 0, %s36
      %s53 = sphi 0, %s37
      %s59 = sphi 0, %s61
      %s62 = sphi 0, %s59
      %s63 = sphi 0, %s62
      %s79 = sphi 0, %s63
      %s87 = sphi 0, %s89
      %s90 = sphi 0, %s87
      %s91 = sphi 0, %s90
      %s107 = sphi 0, %s91
      %s115 = sphi 0, %s117
      %s118 = sphi 0, %s115
      %s119 = sphi 0, %s118
      %s135 = sphi 0, %s119
      %s143 = sphi 0, %s145
      %s146 = sphi 0, %s143
      %s147 = sphi 0, %s146
      %s163 = sphi 0, %s147
    $region4: #{criterion_ohem_dsn2.1} parent=1 // loop_header_branch
      %14 = sbr.rel (%p12) target = $region8
    $region5: #{criterion_ohem_dsn2.1} parent=1 // loop_body
      %s16 = ssub.s32 %s11, 1
      %s17 = ssub.s32 %s11, 2
      %s24 = sadd.s32 1, %s19
      %p25 = scmp.ge.s32.totalorder %s24, 1
      %s26 = scalar_select %p25, 0, %s24
      %s27 = sadd.s32 1, %s18
      %s28 = scalar_select %p25, %s27, %s18
      %p29 = scmp.ge.s32.totalorder %s28, 2
      %s30 = scalar_select %p29, 0, %s28
      %s31 = ssub.s32 %s19, %s26
      %p32 = scmp.eq.s32.totalorder %s31, 0
      %s34 = sadd.s32 %s33, 1
      %s35 = scalar_select %p32, %s33, %s34
      %p38 = pneg %p32
      %p39 = scmp.eq.s32.totalorder %s11, 1
      %p40 = por %p38, %p39
      %p41 = scmp.ne.s32.totalorder %s33, %s36
      %p42 = scmp.eq.s32.totalorder %s11, 0
      %p43 = por %p41, %p42
      %p44 = scmp.ne.s32.totalorder %s33, %s36
      %p45 = scmp.eq.s32.totalorder %s16, 1
      %p46 = por %p44, %p45
      %p47 = scmp.ne.s32.totalorder %s36, %s37
      %p48 = scmp.eq.s32.totalorder %s16, 0
      %p49 = por %p47, %p48
      %p50 = scmp.ne.s32.totalorder %s36, %s37
      %p51 = scmp.eq.s32.totalorder %s17, 1
      %p52 = por %p50, %p51
      %p54 = scmp.ne.s32.totalorder %s37, %s53
      %p55 = scmp.eq.s32.totalorder %s17, 0
      %p56 = por %p54, %p55
      %s57 = ssub.s32 %s18, %s30
      %p58 = scmp.eq.s32.totalorder %s57, 0
      %s60 = sadd.s32 %s59, 1
      %s61 = scalar_select %p58, %s59, %s60
      %p64 = pneg %p58
      %p65 = scmp.eq.s32.totalorder %s11, 1
      %p66 = por %p64, %p65
      %p67 = scmp.ne.s32.totalorder %s59, %s62
      %p68 = scmp.eq.s32.totalorder %s11, 0
      %p69 = por %p67, %p68
      %p70 = scmp.ne.s32.totalorder %s59, %s62
      %p71 = scmp.eq.s32.totalorder %s16, 1
      %p72 = por %p70, %p71
      %p73 = scmp.ne.s32.totalorder %s62, %s63
      %p74 = scmp.eq.s32.totalorder %s16, 0
      %p75 = por %p73, %p74
      %p76 = scmp.ne.s32.totalorder %s62, %s63
      %p77 = scmp.eq.s32.totalorder %s17, 1
      %p78 = por %p76, %p77
      %p80 = scmp.ne.s32.totalorder %s63, %s79
      %p81 = scmp.eq.s32.totalorder %s17, 0
      %p82 = por %p80, %p81
      %s83 = ssub.s32 %s18, %s30
      %s84 = ssub.s32 %s19, %s26
      %s85 = sor.u32 %s83, %s84
      %p86 = scmp.eq.s32.totalorder %s85, 0
      %s88 = sadd.s32 %s87, 1
      %s89 = scalar_select %p86, %s87, %s88
      %p92 = pneg %p86
      %p93 = scmp.eq.s32.totalorder %s11, 1
      %p94 = por %p92, %p93
      %p95 = scmp.ne.s32.totalorder %s87, %s90
      %p96 = scmp.eq.s32.totalorder %s11, 0
      %p97 = por %p95, %p96
      %p98 = scmp.ne.s32.totalorder %s87, %s90
      %p99 = scmp.eq.s32.totalorder %s16, 1
      %p100 = por %p98, %p99
      %p101 = scmp.ne.s32.totalorder %s90, %s91
      %p102 = scmp.eq.s32.totalorder %s16, 0
      %p103 = por %p101, %p102
      %p104 = scmp.ne.s32.totalorder %s90, %s91
      %p105 = scmp.eq.s32.totalorder %s17, 1
      %p106 = por %p104, %p105
      %p108 = scmp.ne.s32.totalorder %s91, %s107
      %p109 = scmp.eq.s32.totalorder %s17, 0
      %p110 = por %p108, %p109
      %s111 = ssub.s32 %s18, %s30
      %s112 = ssub.s32 %s19, %s26
      %s113 = sor.u32 %s111, %s112
      %p114 = scmp.eq.s32.totalorder %s113, 0
      %s116 = sadd.s32 %s115, 1
      %s117 = scalar_select %p114, %s115, %s116
      %p120 = pneg %p114
      %p121 = scmp.eq.s32.totalorder %s11, 1
      %p122 = por %p120, %p121
      %p123 = scmp.ne.s32.totalorder %s115, %s118
      %p124 = scmp.eq.s32.totalorder %s11, 0
      %p125 = por %p123, %p124
      %p126 = scmp.ne.s32.totalorder %s115, %s118
      %p127 = scmp.eq.s32.totalorder %s16, 1
      %p128 = por %p126, %p127
      %p129 = scmp.ne.s32.totalorder %s118, %s119
      %p130 = scmp.eq.s32.totalorder %s16, 0
      %p131 = por %p129, %p130
      %p132 = scmp.ne.s32.totalorder %s118, %s119
      %p133 = scmp.eq.s32.totalorder %s17, 1
      %p134 = por %p132, %p133
      %p136 = scmp.ne.s32.totalorder %s119, %s135
      %p137 = scmp.eq.s32.totalorder %s17, 0
      %p138 = por %p136, %p137
      %s139 = ssub.s32 %s18, %s30
      %s140 = ssub.s32 %s19, %s26
      %s141 = sor.u32 %s139, %s140
      %p142 = scmp.eq.s32.totalorder %s141, 0
      %s144 = sadd.s32 %s143, 1
      %s145 = scalar_select %p142, %s143, %s144
      %p148 = pneg %p142
      %p149 = scmp.eq.s32.totalorder %s11, 1
      %p150 = por %p148, %p149
      %p151 = scmp.ne.s32.totalorder %s143, %s146
      %p152 = scmp.eq.s32.totalorder %s11, 0
      %p153 = por %p151, %p152
      %p154 = scmp.ne.s32.totalorder %s143, %s146
      %p155 = scmp.eq.s32.totalorder %s16, 1
      %p156 = por %p154, %p155
      %p157 = scmp.ne.s32.totalorder %s146, %s147
      %p158 = scmp.eq.s32.totalorder %s16, 0
      %p159 = por %p157, %p158
      %p160 = scmp.ne.s32.totalorder %s146, %s147
      %p161 = scmp.eq.s32.totalorder %s17, 1
      %p162 = por %p160, %p161
      %p164 = scmp.ne.s32.totalorder %s147, %s163
      %p165 = scmp.eq.s32.totalorder %s17, 0
      %p166 = por %p164, %p165
      %p167 = scmp.le.s32.totalorder 1, %s11
      %p168 = scmp.lt.s32.totalorder %s11, 3
      %p169 = pnand %p167, %p168
      %p170 = pneg %p169
      // Predicated region
      $region9: #{criterion_ohem_dsn2.1} parent=5 // pred_check
        _
      $region10: #{criterion_ohem_dsn2.1} parent=5 // pred_check_branch
        %172 = sbr.rel (%p169) target = $region12
      $region11: #{criterion_ohem_dsn2.1} parent=5 // pred_region
        %s173 = ssub.s32 %s11, 1
        // Predicated region
        $region13: #{criterion_ohem_dsn2.1} parent=11 // pred_check
          %p174 = pneg %p49
        $region14: #{criterion_ohem_dsn2.1} parent=11 // pred_check_branch
          %176 = sbr.rel (%p174) target = $region16
        $region15: #{criterion_ohem_dsn2.1} parent=11 // pred_region
          %s177 = smul.u32 2, %s21
          %p178 = scmp.lt.s32.totalorder %s177, 1
          %s179 = scalar_select %p178, %s177, 1
          %s180 = smul.addr %s179, 8
          %s181 = scalar_lea.vmem %s0, %s180
          %s182 = smul.u32 2, %s21
        $region16: #{criterion_ohem_dsn2.1} parent=11 // pred_fallthru
          _
      $region12: #{criterion_ohem_dsn2.1} parent=5 // pred_fallthru
        _
      %p183 = scmp.lt.s32.totalorder %s11, 2
      // Predicated region
      $region17: #{criterion_ohem_dsn2.1} parent=5 // pred_check
        %p184 = pneg %p183
      $region18: #{criterion_ohem_dsn2.1} parent=5 // pred_check_branch
        %186 = sbr.rel (%p184) target = $region20
      $region19: #{criterion_ohem_dsn2.1} parent=5 // pred_region
        // Predicated region
        $region21: #{criterion_ohem_dsn2.1} parent=19 // pred_check
          %p187 = pneg %p69
        $region22: #{criterion_ohem_dsn2.1} parent=19 // pred_check_branch
          %189 = sbr.rel (%p187) target = $region24
        $region23: #{criterion_ohem_dsn2.1} parent=19 // pred_region
          %p190 = scmp.lt.s32.totalorder %s18, 1
          %s191 = scalar_select %p190, %s18, 1
          %s192 = smul.addr %s191, 4
          %s193 = smul.addr %s192, 8
          %s194 = scalar_lea.vmem %s1, %s193
        $region24: #{criterion_ohem_dsn2.1} parent=19 // pred_fallthru
          _
        // Predicated region
        $region25: #{criterion_ohem_dsn2.1} parent=19 // pred_check
          %p195 = pneg %p97
        $region26: #{criterion_ohem_dsn2.1} parent=19 // pred_check_branch
          %197 = sbr.rel (%p195) target = $region28
        $region27: #{criterion_ohem_dsn2.1} parent=19 // pred_region
          %s198 = smul.u32 2, %s19
          %p199 = scmp.lt.s32.totalorder %s18, 1
          %s200 = scalar_select %p199, %s18, 1
          %p201 = scmp.lt.s32.totalorder %s198, 1
          %s202 = scalar_select %p201, %s198, 1
          %s203 = smul.addr %s200, 2
          %s204 = sadd.s32 %s202, %s203
          %s205 = smul.addr %s204, 8
          %s206 = scalar_lea.vmem %s2, %s205
          %s207 = smul.u32 2, %s19
        $region28: #{criterion_ohem_dsn2.1} parent=19 // pred_fallthru
          _
      $region20: #{criterion_ohem_dsn2.1} parent=5 // pred_fallthru
        _
      %p208 = scmp.le.s32.totalorder 1, %s11
      %p209 = scmp.lt.s32.totalorder %s11, 3
      %p210 = pnand %p208, %p209
      %p211 = pneg %p210
      // Predicated region
      $region29: #{criterion_ohem_dsn2.1} parent=5 // pred_check
        _
      $region30: #{criterion_ohem_dsn2.1} parent=5 // pred_check_branch
        %213 = sbr.rel (%p210) target = $region32
      $region31: #{criterion_ohem_dsn2.1} parent=5 // pred_region
        %s214 = ssub.s32 %s11, 1
        %s215 = smul.u32 2, %s21
        %p216 = scmp.lt.s32.totalorder %s215, 1
        %s217 = scalar_select %p216, %s215, 1
        %s218 = smul.addr %s217, 8
        %s219 = scalar_lea.vmem %s0, %s218
        %p220 = pneg %p49
        %p221 = pneg %p46
        %p222 = scmp.lt.s32.totalorder %s20, 1
        %s223 = scalar_select %p222, %s20, 1
        %s224 = smul.addr %s223, 4
        %s225 = smul.addr %s224, 8
        %s226 = scalar_lea.vmem %s1, %s225
        %p227 = pneg %p75
        %p228 = pneg %p72
        %s229 = smul.u32 2, %s21
        %p230 = scmp.lt.s32.totalorder %s20, 1
        %s231 = scalar_select %p230, %s20, 1
        %p232 = scmp.lt.s32.totalorder %s229, 1
        %s233 = scalar_select %p232, %s229, 1
        %s234 = smul.addr %s231, 2
        %s235 = sadd.s32 %s233, %s234
        %s236 = smul.addr %s235, 8
        %s237 = scalar_lea.vmem %s2, %s236
        %p238 = pneg %p103
        %p239 = pneg %p100
        %p240 = pneg %p131
        %p241 = pneg %p128
        %s242 = sand.u32 %s118, 1
        %s243 = sand.u32 %s118, 1
        %s244 = smul.addr %s243, 32
        %s245 = scalar_lea.vmem [#allocation3], %s244
        %p246 = pneg %p159
        %p247 = pneg %p156
        %p248 = scmp.lt.s32.totalorder %s20, 1
        %s249 = scalar_select %p248, %s20, 1
        %p250 = scmp.lt.s32.totalorder %s21, 0
        %s251 = scalar_select %p250, %s21, 0
        %s252 = sadd.s32 %s251, %s249
        %s253 = smul.addr %s252, 8
        %s254 = scalar_lea.vmem %s4, %s253
        %s255 = smul.u32 2, %s21
        %p256 = scmp.lt.s32.totalorder %s255, 1
        %s257 = scalar_select %p256, %s255, 1
        %s258 = smul.addr %s257, 8
        %s259 = scalar_lea.vmem %s0, %s258
        %s260 = smul.u32 2, %s21
        %p261 = scmp.lt.s32.totalorder %s20, 1
        %s262 = scalar_select %p261, %s20, 1
        %s263 = smul.addr %s262, 4
        %s264 = smul.addr %s263, 8
        %s265 = scalar_lea.vmem %s1, %s264
        %s266 = smul.u32 2, %s21
        %p267 = scmp.lt.s32.totalorder %s20, 1
        %s268 = scalar_select %p267, %s20, 1
        %p269 = scmp.lt.s32.totalorder %s266, 1
        %s270 = scalar_select %p269, %s266, 1
        %s271 = smul.addr %s268, 2
        %s272 = sadd.s32 %s270, %s271
        %s273 = smul.addr %s272, 8
        %s274 = scalar_lea.vmem %s2, %s273
        %s275 = smul.u32 2, %s21
        %s276 = smul.u32 2, %s21
        %p277 = scmp.lt.s32.totalorder %s20, 1
        %s278 = scalar_select %p277, %s20, 1
        %p279 = scmp.lt.s32.totalorder %s21, 0
        %s280 = scalar_select %p279, %s21, 0
        %s281 = sadd.s32 %s280, %s278
        %s282 = smul.addr %s281, 8
        %s283 = scalar_lea.vmem %s4, %s282
        %v284 = vld [vmem:[%s259] sm:$0xff]
        %v285 = vld [vmem:[%s259 + $0x8] sm:$0xff]
        %v286 = vld [vmem:[%s265] sm:$0xff]
        %v287 = vld [vmem:[%s265 + $0x8] sm:$0xff]
        %v288 = vld [vmem:[%s265 + $0x10] sm:$0xff]
        %v289 = vld [vmem:[%s265 + $0x18] sm:$0xff]
        %vm290 = vcmask 64512
        %v292 = vsel %vm290, %v284, 0
        %v295 = vsel %vm290, %v285, 0
        %297 = vmatpush.msra.mxu0 0.0
        %298 = vmatpush.msra.mxu0 0.0
        %299 = vmatpush.msra.mxu0 0.0
        %300 = vmatpush.msra.mxu0 0.0
        %301 = vmatpush.msra.mxu0 0.0
        %302 = vmatpush.msra.mxu0 0.0
        %303 = vmatpush.msra.mxu0 0.0
        %304 = vmatpush.msra.mxu0 0.0
        %305 = vmatpush.msra.mxu0 0.0
        %306 = vmatpush.msra.mxu0 0.0
        %307 = vmatpush.msra.mxu0 0.0
        %308 = vmatpush.msra.mxu0 0.0
        %309 = vmatpush.msra.mxu0 0.0
        %310 = vmatpush.msra.mxu0 0.0
        %311 = vmatpush.msra.mxu0 0.0
        %312 = vmatpush.msra.mxu0 %v286
        %313 = vmatmul.f32.gmra.mxu0 %v292
        %v314 = vpop.f32.mrf.mxu0
        %v315 = vadd.f32 0.0, %v314
        %316 = vmatmul.f32.gmra.mxu0 %v295
        %v317 = vpop.f32.mrf.mxu0
        %v318 = vadd.f32 0.0, %v317
        %319 = vdwg.mxu0
        %320 = vmatpush.msra.mxu0 0.0
        %321 = vmatpush.msra.mxu0 0.0
        %322 = vmatpush.msra.mxu0 0.0
        %323 = vmatpush.msra.mxu0 0.0
        %324 = vmatpush.msra.mxu0 0.0
        %325 = vmatpush.msra.mxu0 0.0
        %326 = vmatpush.msra.mxu0 0.0
        %327 = vmatpush.msra.mxu0 0.0
        %328 = vmatpush.msra.mxu0 0.0
        %329 = vmatpush.msra.mxu0 0.0
        %330 = vmatpush.msra.mxu0 0.0
        %331 = vmatpush.msra.mxu0 0.0
        %332 = vmatpush.msra.mxu0 0.0
        %333 = vmatpush.msra.mxu0 0.0
        %334 = vmatpush.msra.mxu0 0.0
        %335 = vmatpush.msra.mxu0 %v287
        %336 = vmatmul.f32.gmra.mxu0 %v292
        %v337 = vpop.f32.mrf.mxu0
        %v338 = vadd.f32 0.0, %v337
        %339 = vmatmul.f32.gmra.mxu0 %v295
        %v340 = vpop.f32.mrf.mxu0
        %v341 = vadd.f32 0.0, %v340
        %342 = vdwg.mxu0
        %343 = vmatpush.msra.mxu0 0.0
        %344 = vmatpush.msra.mxu0 0.0
        %345 = vmatpush.msra.mxu0 0.0
        %346 = vmatpush.msra.mxu0 0.0
        %347 = vmatpush.msra.mxu0 0.0
        %348 = vmatpush.msra.mxu0 0.0
        %349 = vmatpush.msra.mxu0 0.0
        %350 = vmatpush.msra.mxu0 0.0
        %351 = vmatpush.msra.mxu0 0.0
        %352 = vmatpush.msra.mxu0 0.0
        %353 = vmatpush.msra.mxu0 0.0
        %354 = vmatpush.msra.mxu0 0.0
        %355 = vmatpush.msra.mxu0 0.0
        %356 = vmatpush.msra.mxu0 0.0
        %357 = vmatpush.msra.mxu0 0.0
        %358 = vmatpush.msra.mxu0 %v288
        %359 = vmatmul.f32.gmra.mxu0 %v292
        %v360 = vpop.f32.mrf.mxu0
        %v361 = vadd.f32 0.0, %v360
        %362 = vmatmul.f32.gmra.mxu0 %v295
        %v363 = vpop.f32.mrf.mxu0
        %v364 = vadd.f32 0.0, %v363
        %365 = vdwg.mxu0
        %366 = vmatpush.msra.mxu0 0.0
        %367 = vmatpush.msra.mxu0 0.0
        %368 = vmatpush.msra.mxu0 0.0
        %369 = vmatpush.msra.mxu0 0.0
        %370 = vmatpush.msra.mxu0 0.0
        %371 = vmatpush.msra.mxu0 0.0
        %372 = vmatpush.msra.mxu0 0.0
        %373 = vmatpush.msra.mxu0 0.0
        %374 = vmatpush.msra.mxu0 0.0
        %375 = vmatpush.msra.mxu0 0.0
        %376 = vmatpush.msra.mxu0 0.0
        %377 = vmatpush.msra.mxu0 0.0
        %378 = vmatpush.msra.mxu0 0.0
        %379 = vmatpush.msra.mxu0 0.0
        %380 = vmatpush.msra.mxu0 0.0
        %381 = vmatpush.msra.mxu0 %v289
        %382 = vmatmul.f32.gmra.mxu0 %v292
        %v383 = vpop.f32.mrf.mxu0
        %v384 = vadd.f32 0.0, %v383
        %385 = vmatmul.f32.gmra.mxu0 %v295
        %v386 = vpop.f32.mrf.mxu0
        %v387 = vadd.f32 0.0, %v386
        %388 = vdwg.mxu0
        %389 = vst [vmem:[#allocation2] sm:$0xff] %v315
        %390 = vst [vmem:[#allocation2 + $0x8] sm:$0xff] %v338
        %391 = vst [vmem:[#allocation2 + $0x10] sm:$0xff] %v361
        %392 = vst [vmem:[#allocation2 + $0x18] sm:$0xff] %v384
        %393 = vst [vmem:[#allocation2 + $0x20] sm:$0xff] %v318
        %394 = vst [vmem:[#allocation2 + $0x28] sm:$0xff] %v341
        %395 = vst [vmem:[#allocation2 + $0x30] sm:$0xff] %v364
        %396 = vst [vmem:[#allocation2 + $0x38] sm:$0xff] %v387
        %v397 = vld [vmem:[%s274] sm:$0xff]
        %v398 = vld [vmem:[%s274 + $0x8] sm:$0xff]
        %vm399 = vcmp.ne.s32.totalorder %v397, 255
        %vm400 = vcmp.ne.s32.totalorder %v398, 255
        %v401 = vsel %vm399, 1, 0
        %v402 = vsel %vm400, 1, 0
        %v403 = vcvt.s32.f32 %v401
        %v404 = vcvt.s32.f32 %v402
        %v405 = vld [vmem:[#allocation2] sm:$0xff]
        %v406 = vld [vmem:[#allocation2 + $0x20] sm:$0xff]
        %v407 = vld [vmem:[#allocation2 + $0x8] sm:$0xff]
        %v408 = vld [vmem:[#allocation2 + $0x28] sm:$0xff]
        %v409 = vmax.f32 %v405, %v407
        %v410 = vmax.f32 %v406, %v408
        %v411 = vld [vmem:[#allocation2 + $0x10] sm:$0xff]
        %v412 = vld [vmem:[#allocation2 + $0x30] sm:$0xff]
        %v413 = vmax.f32 %v409, %v411
        %v414 = vmax.f32 %v410, %v412
        %v415 = vld [vmem:[#allocation2 + $0x18] sm:$0xff]
        %v416 = vld [vmem:[#allocation2 + $0x38] sm:$0xff]
        %v417 = vmax.f32 %v413, %v415
        %v418 = vmax.f32 %v414, %v416
        %v419 = vsub.f32 %v405, %v417
        %v420 = vsub.f32 %v406, %v418
        %v421 = vmul.f32 %v419, 1.442695
        %v422 = vpow.pop %v421
        %v423 = vmul.f32 %v420, 1.442695
        %v424 = vpow.pop %v423
        %v425 = vadd.f32 %v422, 0.0
        %v426 = vadd.f32 %v424, 0.0
        %vm427 = vcmp.eq.s32.totalorder %v397, 0
        %vm428 = vcmp.eq.s32.totalorder %v398, 0
        %v429 = vsel %vm427, %v419, 0.0
        %v430 = vsel %vm428, %v420, 0.0
        %v431 = vadd.f32 %v429, 0.0
        %v432 = vadd.f32 %v430, 0.0
        %v433 = vsel %vm427, 1, 0
        %v434 = vsel %vm428, 1, 0
        %v435 = vcvt.s32.f32 %v433
        %v436 = vcvt.s32.f32 %v434
        %v437 = vadd.f32 %v435, 0.0
        %v438 = vadd.f32 %v436, 0.0
        %439 = vst [vmem:[#allocation2] sm:$0xff] %v422
        %440 = vst [vmem:[#allocation2 + $0x20] sm:$0xff] %v424
        %v441 = vld [vmem:[#allocation2 + $0x8] sm:$0xff]
        %v442 = vld [vmem:[#allocation2 + $0x28] sm:$0xff]
        %v443 = vsub.f32 %v441, %v417
        %v444 = vsub.f32 %v442, %v418
        %v445 = vmul.f32 %v443, 1.442695
        %v446 = vpow.pop %v445
        %v447 = vmul.f32 %v444, 1.442695
        %v448 = vpow.pop %v447
        %v449 = vadd.f32 %v425, %v446
        %v450 = vadd.f32 %v426, %v448
        %vm451 = vcmp.eq.s32.totalorder %v397, 1
        %vm452 = vcmp.eq.s32.totalorder %v398, 1
        %v453 = vsel %vm451, %v443, 0.0
        %v454 = vsel %vm452, %v444, 0.0
        %v455 = vadd.f32 %v431, %v453
        %v456 = vadd.f32 %v432, %v454
        %v457 = vsel %vm451, 1, 0
        %v458 = vsel %vm452, 1, 0
        %v459 = vcvt.s32.f32 %v457
        %v460 = vcvt.s32.f32 %v458
        %v461 = vadd.f32 %v437, %v459
        %v462 = vadd.f32 %v438, %v460
        %463 = vst [vmem:[#allocation2 + $0x8] sm:$0xff] %v446
        %464 = vst [vmem:[#allocation2 + $0x28] sm:$0xff] %v448
        %v465 = vld [vmem:[#allocation2 + $0x10] sm:$0xff]
        %v466 = vld [vmem:[#allocation2 + $0x30] sm:$0xff]
        %v467 = vsub.f32 %v465, %v417
        %v468 = vsub.f32 %v466, %v418
        %v469 = vmul.f32 %v467, 1.442695
        %v470 = vpow.pop %v469
        %v471 = vmul.f32 %v468, 1.442695
        %v472 = vpow.pop %v471
        %v473 = vadd.f32 %v449, %v470
        %v474 = vadd.f32 %v450, %v472
        %vm475 = vcmp.eq.s32.totalorder %v397, 2
        %vm476 = vcmp.eq.s32.totalorder %v398, 2
        %v477 = vsel %vm475, %v467, 0.0
        %v478 = vsel %vm476, %v468, 0.0
        %v479 = vadd.f32 %v455, %v477
        %v480 = vadd.f32 %v456, %v478
        %v481 = vsel %vm475, 1, 0
        %v482 = vsel %vm476, 1, 0
        %v483 = vcvt.s32.f32 %v481
        %v484 = vcvt.s32.f32 %v482
        %v485 = vadd.f32 %v461, %v483
        %v486 = vadd.f32 %v462, %v484
        %487 = vst [vmem:[#allocation2 + $0x10] sm:$0xff] %v470
        %488 = vst [vmem:[#allocation2 + $0x30] sm:$0xff] %v472
        %v489 = vld [vmem:[#allocation2 + $0x18] sm:$0xff]
        %v490 = vld [vmem:[#allocation2 + $0x38] sm:$0xff]
        %v491 = vsub.f32 %v489, %v417
        %v492 = vsub.f32 %v490, %v418
        %v493 = vmul.f32 %v491, 1.442695
        %v494 = vpow.pop %v493
        %v495 = vmul.f32 %v492, 1.442695
        %v496 = vpow.pop %v495
        %v497 = vadd.f32 %v473, %v494
        %v498 = vadd.f32 %v474, %v496
        %vm499 = vcmp.eq.s32.totalorder %v397, 3
        %vm500 = vcmp.eq.s32.totalorder %v398, 3
        %v501 = vsel %vm499, %v491, 0.0
        %v502 = vsel %vm500, %v492, 0.0
        %v503 = vadd.f32 %v479, %v501
        %v504 = vadd.f32 %v480, %v502
        %v505 = vsel %vm499, 1, 0
        %v506 = vsel %vm500, 1, 0
        %v507 = vcvt.s32.f32 %v505
        %v508 = vcvt.s32.f32 %v506
        %v509 = vadd.f32 %v485, %v507
        %v510 = vadd.f32 %v486, %v508
        %511 = vst [vmem:[#allocation2 + $0x18] sm:$0xff] %v494
        %512 = vst [vmem:[#allocation2 + $0x38] sm:$0xff] %v496
        %v513 = vlog2.pop %v497
        %v514 = vmul.f32 %v513, 0.6931472
        %v515 = vlog2.pop %v498
        %v516 = vmul.f32 %v515, 0.6931472
        %v517 = vrcp.pop %v497
        %v518 = vmul.f32 %v497, %v517
        %v519 = vsub.f32 1.0, %v518
        %v520 = vmul.f32 %v517, %v519
        %v521 = vadd.f32 %v517, %v520
        %vm522 = vweird.f32 %v497
        %vm523 = vweird.f32 %v517
        %vm524 = vmor %vm522, %vm523
        %v525 = vsel %vm524, %v517, %v521
        %v526 = vand.u32 2147483647, %v497
        %vm527 = vcmp.eq.f32.partialorder %v526, 8.507059e+37
        %v528 = vand.u32 %v497, 2147483648
        %v529 = vor.u32 1.1754944e-38, %v528
        %v530 = vsel %vm527, %v529, %v525
        %v531 = vmul.f32 1.0, %v530
        %v532 = vrcp.pop %v498
        %v533 = vmul.f32 %v498, %v532
        %v534 = vsub.f32 1.0, %v533
        %v535 = vmul.f32 %v532, %v534
        %v536 = vadd.f32 %v532, %v535
        %vm537 = vweird.f32 %v498
        %vm538 = vweird.f32 %v532
        %vm539 = vmor %vm537, %vm538
        %v540 = vsel %vm539, %v532, %v536
        %v541 = vand.u32 2147483647, %v498
        %vm542 = vcmp.eq.f32.partialorder %v541, 8.507059e+37
        %v543 = vand.u32 %v498, 2147483648
        %v544 = vor.u32 1.1754944e-38, %v543
        %v545 = vsel %vm542, %v544, %v540
        %v546 = vmul.f32 1.0, %v545
        %v547 = vld [vmem:[#allocation2] sm:$0xff]
        %v548 = vld [vmem:[#allocation2 + $0x20] sm:$0xff]
        %v549 = vmul.f32 %v547, %v531
        %v550 = vmul.f32 %v548, %v546
        %v551 = vsub.f32 %v435, %v549
        %v552 = vsub.f32 %v436, %v550
        %v553 = vand.u32 2147483647, %v551
        %v554 = vand.u32 2147483647, %v552
        %v555 = vmul.f32 %v553, %v403
        %v556 = vmul.f32 %v554, %v404
        %v557 = vpack.c.bf16 %v555, %v555
        %v558 = vpack.c.bf16 %v556, %v556
        %559 = vst [vmem:[%s245] sm:$0xf] %v557
        %560 = vst [vmem:[%s245 + $0x4] sm:$0xf] %v558
        %v561 = vld [vmem:[#allocation2 + $0x8] sm:$0xff]
        %v562 = vld [vmem:[#allocation2 + $0x28] sm:$0xff]
        %v563 = vmul.f32 %v561, %v531
        %v564 = vmul.f32 %v562, %v546
        %v565 = vsub.f32 %v459, %v563
        %v566 = vsub.f32 %v460, %v564
        %v567 = vand.u32 2147483647, %v565
        %v568 = vand.u32 2147483647, %v566
        %v569 = vmul.f32 %v567, %v403
        %v570 = vmul.f32 %v568, %v404
        %v571 = vpack.c.bf16 %v569, %v569
        %v572 = vpack.c.bf16 %v570, %v570
        %s573 = scalar_lea.vmem %s245, 8 [#allocation3]
        %574 = vst [vmem:[%s573] sm:$0xf] %v571
        %575 = vst [vmem:[%s573 + $0x4] sm:$0xf] %v572
        %v576 = vld [vmem:[#allocation2 + $0x10] sm:$0xff]
        %v577 = vld [vmem:[#allocation2 + $0x30] sm:$0xff]
        %v578 = vmul.f32 %v576, %v531
        %v579 = vmul.f32 %v577, %v546
        %v580 = vsub.f32 %v483, %v578
        %v581 = vsub.f32 %v484, %v579
        %v582 = vand.u32 2147483647, %v580
        %v583 = vand.u32 2147483647, %v581
        %v584 = vmul.f32 %v582, %v403
        %v585 = vmul.f32 %v583, %v404
        %v586 = vpack.c.bf16 %v584, %v584
        %v587 = vpack.c.bf16 %v585, %v585
        %s588 = scalar_lea.vmem %s245, 16 [#allocation3]
        %589 = vst [vmem:[%s588] sm:$0xf] %v586
        %590 = vst [vmem:[%s588 + $0x4] sm:$0xf] %v587
        %v591 = vld [vmem:[#allocation2 + $0x18] sm:$0xff]
        %v592 = vld [vmem:[#allocation2 + $0x38] sm:$0xff]
        %v593 = vmul.f32 %v591, %v531
        %v594 = vmul.f32 %v592, %v546
        %v595 = vsub.f32 %v507, %v593
        %v596 = vsub.f32 %v508, %v594
        %v597 = vand.u32 2147483647, %v595
        %v598 = vand.u32 2147483647, %v596
        %v599 = vmul.f32 %v597, %v403
        %v600 = vmul.f32 %v598, %v404
        %v601 = vpack.c.bf16 %v599, %v599
        %v602 = vpack.c.bf16 %v600, %v600
        %s603 = scalar_lea.vmem %s245, 24 [#allocation3]
        %604 = vst [vmem:[%s603] sm:$0xf] %v601
        %605 = vst [vmem:[%s603 + $0x4] sm:$0xf] %v602
        %v606 = vsub.f32 %v514, %v503
        %v607 = vsub.f32 %v516, %v504
        %v608 = vmul.f32 %v606, %v509
        %v609 = vmul.f32 %v607, %v510
        %v610 = vadd.f32 %v608, %v609
        %611 = vadd.xlane.f32.xlu0 %v610
        %v612 = vpop.xlane.xlu0 %611
        %v613 = vrot.slane %v612, 4
        %v614 = vadd.f32 %v612, %v613
        %v615 = vrot.slane %v614, 2
        %v616 = vadd.f32 %v614, %v615
        %v617 = vrot.slane %v616, 1
        %v618 = vadd.f32 %v616, %v617
        %s619 = vtos %v618
        %v620 = vadd.f32 %v403, %v404
        %621 = vadd.xlane.f32.xlu0 %v620
        %v622 = vpop.xlane.xlu0 %621
        %v623 = vrot.slane %v622, 4
        %v624 = vadd.f32 %v622, %v623
        %v625 = vrot.slane %v624, 2
        %v626 = vadd.f32 %v624, %v625
        %v627 = vrot.slane %v626, 1
        %v628 = vadd.f32 %v626, %v627
        %s629 = vtos %v628
        %v630 = vlaneseq
        %v631 = vshrl.u32 %v630, 7
        %vm632 = vcmp.eq.s32.totalorder %v631, 0
        %vm633 = vcmp.eq.s32.totalorder %v631, 1
        %v634 = vstv %s629
        %v635 = vsel %vm633, %v634, 0.0
        %v636 = vstv %s619
        %v637 = vsel %vm632, %v636, %v635
        %638 = vst [vmem:[%s283] sm:$0xff] %v637
        %s639 = sand.u32 %s118, 1
        %s640 = sand.u32 %s118, 1
        %s641 = smul.addr %s640, 32
        %s642 = scalar_lea.vmem [#allocation3], %s641
        %p643 = scmp.lt.s32.totalorder %s20, 1
        %s644 = scalar_select %p643, %s20, 1
        %p645 = scmp.lt.s32.totalorder %s21, 0
        %s646 = scalar_select %p645, %s21, 0
        %s647 = sadd.s32 %s646, %s644
        %s648 = smul.addr %s647, 8
        %s649 = scalar_lea.vmem %s4, %s648
        // Predicated region
        $region33: #{criterion_ohem_dsn2.1} parent=31 // pred_check
          %p650 = pneg %p128
        $region34: #{criterion_ohem_dsn2.1} parent=31 // pred_check_branch
          %652 = sbr.rel (%p650) target = $region36
        $region35: #{criterion_ohem_dsn2.1} parent=31 // pred_region
          %s653 = smul.u32 2, %s21
          %s654 = smul.addr %s20, 2
          %s655 = sadd.s32 %s653, %s654
          %s656 = smul.addr %s655, 4
          %s657 = scalar_lea.vmem %s3, %s656
          // Predicated region
          $region37: #{criterion_ohem_dsn2.1} parent=35 // pred_check
            _
          $region38: #{criterion_ohem_dsn2.1} parent=35 // pred_check_branch
            %659 = sbr.rel (0) target = $region40
          $region39: #{criterion_ohem_dsn2.1} parent=35 // pred_region
            // Predicated region
            $region41: #{criterion_ohem_dsn2.1} parent=39 // pred_check
              _
            $region42: #{criterion_ohem_dsn2.1} parent=39 // pred_check_branch
              %661 = sbr.rel target = $region44
            $region43: #{criterion_ohem_dsn2.1} parent=39 // pred_region
              // Predicated region
              $region56: #{criterion_ohem_dsn2.1} parent=43 // pred_check
                _
              $region57: #{criterion_ohem_dsn2.1} parent=43 // pred_check_branch
                %691 = sbr.rel (0) target = $region59
              $region58: #{criterion_ohem_dsn2.1} parent=43 // pred_region
                loop: start=0, step=1, limit=1
                $region60: #{criterion_ohem_dsn2.1} parent=58 // loop_pre_header
                  _
                $region61: #{criterion_ohem_dsn2.1} parent=58 // loop_header
                  %s693 = sphi 0, %s697
                  %p694 = scmp.ge.s32.totalorder %s693, 1
                  %s698 = sphi %s642, %s642
                  %s699 = sphi %s657, %s657
                $region62: #{criterion_ohem_dsn2.1} parent=58 // loop_header_branch
                  %696 = sbr.rel (%p694) target = $region66
                $region63: #{criterion_ohem_dsn2.1} parent=58 // loop_body
                  _
                $region64: #{criterion_ohem_dsn2.1} parent=58 // loop_footer
                  %s697 = sadd.s32 1, %s693
                $region65: #{criterion_ohem_dsn2.1} parent=58 // loop_footer_branch
                  %692 = sbr.rel target = $region61
                $region66: #{criterion_ohem_dsn2.1} parent=58 // loop_exit
                  _
                %s701 = ssub.s32 16, 1
                loop: start=0, step=1, limit=1
                $region67: #{criterion_ohem_dsn2.1} parent=58 // loop_pre_header
                  _
                $region68: #{criterion_ohem_dsn2.1} parent=58 // loop_header
                  %s703 = sphi 0, %s707
                  %p704 = scmp.ge.s32.totalorder %s703, 1
                  %s708 = sphi %s642, %s642
                  %s709 = sphi %s657, %s657
                $region69: #{criterion_ohem_dsn2.1} parent=58 // loop_header_branch
                  %706 = sbr.rel (%p704) target = $region73
                $region70: #{criterion_ohem_dsn2.1} parent=58 // loop_body
                  %v710 = vld [vmem:[%s708] sm:%s701]
                  %711 = vst [vmem:[%s709] sm:%s701] %v710
                  %v712 = vld [vmem:[%s708 + $0x4] sm:%s701]
                  %713 = vst [vmem:[%s709 + $0x4] sm:%s701] %v712
                  %v714 = vld [vmem:[%s708 + $0x8] sm:%s701]
                  %715 = vst [vmem:[%s709 + $0x10] sm:%s701] %v714
                  %v716 = vld [vmem:[%s708 + $0xc] sm:%s701]
                  %717 = vst [vmem:[%s709 + $0x14] sm:%s701] %v716
                  %v718 = vld [vmem:[%s708 + $0x10] sm:%s701]
                  %719 = vst [vmem:[%s709 + $0x20] sm:%s701] %v718
                  %v720 = vld [vmem:[%s708 + $0x14] sm:%s701]
                  %721 = vst [vmem:[%s709 + $0x24] sm:%s701] %v720
                  %v722 = vld [vmem:[%s708 + $0x18] sm:%s701]
                  %723 = vst [vmem:[%s709 + $0x30] sm:%s701] %v722
                  %v724 = vld [vmem:[%s708 + $0x1c] sm:%s701]
                  %725 = vst [vmem:[%s709 + $0x34] sm:%s701] %v724
                $region71: #{criterion_ohem_dsn2.1} parent=58 // loop_footer
                  %s707 = sadd.s32 1, %s703
                $region72: #{criterion_ohem_dsn2.1} parent=58 // loop_footer_branch
                  %702 = sbr.rel target = $region68
                $region73: #{criterion_ohem_dsn2.1} parent=58 // loop_exit
                  _
              $region59: #{criterion_ohem_dsn2.1} parent=43 // pred_fallthru
                _
            $region44: #{criterion_ohem_dsn2.1} parent=39 // pred_fallthru
              _
            // Predicated region
            $region45: #{criterion_ohem_dsn2.1} parent=39 // pred_check
              _
            $region46: #{criterion_ohem_dsn2.1} parent=39 // pred_check_branch
              %663 = sbr.rel (0) target = $region48
            $region47: #{criterion_ohem_dsn2.1} parent=39 // pred_region
              %s665 = ssub.s32 16, 1
              loop: start=0, step=1, limit=1
              $region49: #{criterion_ohem_dsn2.1} parent=47 // loop_pre_header
                _
              $region50: #{criterion_ohem_dsn2.1} parent=47 // loop_header
                %s667 = sphi 0, %s671
                %p668 = scmp.ge.s32.totalorder %s667, 1
                %s672 = sphi %s642, %s642
                %s673 = sphi %s657, %s657
              $region51: #{criterion_ohem_dsn2.1} parent=47 // loop_header_branch
                %670 = sbr.rel (%p668) target = $region55
              $region52: #{criterion_ohem_dsn2.1} parent=47 // loop_body
                %v674 = vld [vmem:[%s672] sm:%s665]
                %675 = vst [vmem:[%s673] sm:%s665] %v674
                %v676 = vld [vmem:[%s672 + $0x4] sm:%s665]
                %677 = vst [vmem:[%s673 + $0x4] sm:%s665] %v676
                %v678 = vld [vmem:[%s672 + $0x8] sm:%s665]
                %679 = vst [vmem:[%s673 + $0x10] sm:%s665] %v678
                %v680 = vld [vmem:[%s672 + $0xc] sm:%s665]
                %681 = vst [vmem:[%s673 + $0x14] sm:%s665] %v680
                %v682 = vld [vmem:[%s672 + $0x10] sm:%s665]
                %683 = vst [vmem:[%s673 + $0x20] sm:%s665] %v682
                %v684 = vld [vmem:[%s672 + $0x14] sm:%s665]
                %685 = vst [vmem:[%s673 + $0x24] sm:%s665] %v684
                %v686 = vld [vmem:[%s672 + $0x18] sm:%s665]
                %687 = vst [vmem:[%s673 + $0x30] sm:%s665] %v686
                %v688 = vld [vmem:[%s672 + $0x1c] sm:%s665]
                %689 = vst [vmem:[%s673 + $0x34] sm:%s665] %v688
              $region53: #{criterion_ohem_dsn2.1} parent=47 // loop_footer
                %s671 = sadd.s32 1, %s667
              $region54: #{criterion_ohem_dsn2.1} parent=47 // loop_footer_branch
                %666 = sbr.rel target = $region50
              $region55: #{criterion_ohem_dsn2.1} parent=47 // loop_exit
                _
            $region48: #{criterion_ohem_dsn2.1} parent=39 // pred_fallthru
              _
          $region40: #{criterion_ohem_dsn2.1} parent=35 // pred_fallthru
            _
          %726 = vnop
        $region36: #{criterion_ohem_dsn2.1} parent=31 // pred_fallthru
          _
        // Predicated region
        $region74: #{criterion_ohem_dsn2.1} parent=31 // pred_check
          %p727 = pneg %p156
        $region75: #{criterion_ohem_dsn2.1} parent=31 // pred_check_branch
          %729 = sbr.rel (%p727) target = $region77
        $region76: #{criterion_ohem_dsn2.1} parent=31 // pred_region
          _
        $region77: #{criterion_ohem_dsn2.1} parent=31 // pred_fallthru
          _
      $region32: #{criterion_ohem_dsn2.1} parent=5 // pred_fallthru
        _
      %p730 = scmp.le.s32.totalorder 2, %s11
      // Predicated region
      $region78: #{criterion_ohem_dsn2.1} parent=5 // pred_check
        %p731 = pneg %p730
      $region79: #{criterion_ohem_dsn2.1} parent=5 // pred_check_branch
        %733 = sbr.rel (%p731) target = $region81
      $region80: #{criterion_ohem_dsn2.1} parent=5 // pred_region
        %s734 = ssub.s32 %s11, 2
        // Predicated region
        $region82: #{criterion_ohem_dsn2.1} parent=80 // pred_check
          %p735 = pneg %p134
        $region83: #{criterion_ohem_dsn2.1} parent=80 // pred_check_branch
          %737 = sbr.rel (%p735) target = $region85
        $region84: #{criterion_ohem_dsn2.1} parent=80 // pred_region
          %s738 = sand.u32 %s119, 1
          %s739 = sand.u32 %s119, 1
          %s740 = smul.addr %s739, 32
          %s741 = scalar_lea.vmem [#allocation3], %s740
        $region85: #{criterion_ohem_dsn2.1} parent=80 // pred_fallthru
          _
        // Predicated region
        $region86: #{criterion_ohem_dsn2.1} parent=80 // pred_check
          %p742 = pneg %p162
        $region87: #{criterion_ohem_dsn2.1} parent=80 // pred_check_branch
          %744 = sbr.rel (%p742) target = $region89
        $region88: #{criterion_ohem_dsn2.1} parent=80 // pred_region
          %p745 = scmp.lt.s32.totalorder %s22, 1
          %s746 = scalar_select %p745, %s22, 1
          %p747 = scmp.lt.s32.totalorder %s23, 0
          %s748 = scalar_select %p747, %s23, 0
          %s749 = sadd.s32 %s748, %s746
          %s750 = smul.addr %s749, 8
          %s751 = scalar_lea.vmem %s4, %s750
        $region89: #{criterion_ohem_dsn2.1} parent=80 // pred_fallthru
          _
      $region81: #{criterion_ohem_dsn2.1} parent=5 // pred_fallthru
        _
    $region6: #{criterion_ohem_dsn2.1} parent=1 // loop_footer
      %s15 = sadd.s32 1, %s11
    $region7: #{criterion_ohem_dsn2.1} parent=1 // loop_footer_branch
      %10 = sbr.rel target = $region3
    $region8: #{criterion_ohem_dsn2.1} parent=1 // loop_exit
      _

</llo_original>
